<compile_context>
chip_gen: v7x
topology: tpu7x:2x2x1
jax: 0.10.0
libtpu: 0.0.40
codegen_flags: <defaults>
</compile_context>

<pallas_src>
import functools
import math

import jax
import jax.numpy as jnp
from jax import lax
from jax.experimental import pallas as pl
from jax.experimental.pallas import tpu as pltpu

EPS = 1e-8  # torch.nn.CosineSimilarity default eps (each norm clamped to eps)


def _round_up(v, m):
    return ((v + m - 1) // m) * m


def _cosine_sim_kernel(x_ref, y_ref, o_ref, *, inv_temp):
    # x_ref: (tm, H), y_ref: (tn, H), o_ref: (tm, tn)
    x = x_ref[...]          # native dtype (bf16 / f32) straight to the MXU
    y = y_ref[...]

    # Contract on H for both operands: x @ y^T without transposing the tile.
    dots = lax.dot_general(
        x, y,
        dimension_numbers=(((1,), (1,)), ((), ())),
        preferred_element_type=jnp.float32)                        # (tm, tn)

    # Norms: accumulate sums of squares in f32 (cheap (tm,1)/(tn,1) work).
    x32 = x.astype(jnp.float32)
    y32 = y.astype(jnp.float32)
    x_norm = jnp.sqrt(jnp.sum(x32 * x32, axis=-1, keepdims=True))  # (tm, 1)
    y_norm = jnp.sqrt(jnp.sum(y32 * y32, axis=-1, keepdims=True))  # (tn, 1)

    # Per-row scales; 1/temp folded into the x-side scale (tm multiplies,
    # not M*N).  Each norm clamped to eps (only matters for ~zero vectors).
    inv_x = inv_temp / jnp.maximum(x_norm, EPS)                    # (tm, 1)
    inv_y = 1.0 / jnp.maximum(y_norm, EPS)                         # (tn, 1)

    o_ref[...] = dots * inv_x * inv_y.T


def similarity(x, y, temp):
    """Replicates Similarity(temp)(x, y) for the SimCSE outer-product
    broadcast pattern x: (..., 1, H) vs y: (1, ..., H)."""
    H = x.shape[-1]
    assert y.shape[-1] == H, (x.shape, y.shape)
    x2 = jnp.reshape(x, (-1, H))   # (M, H)
    y2 = jnp.reshape(y, (-1, H))   # (N, H)
    M, N = x2.shape[0], y2.shape[0]

    out_bshape = jnp.broadcast_shapes(x.shape[:-1], y.shape[:-1])
    # Only the pairwise (outer-product) broadcast pattern is supported here.
    assert math.prod(out_bshape) == M * N, (
        "similarity(): expected x:(...,1,H) vs y:(1,...,H) broadcast pattern")

    # Tile sizes: lane-dense output (tn multiple of 128), tm multiple of 8.
    tm = min(256, _round_up(M, 8))
    tn = min(256, _round_up(N, 128))
    Mp = _round_up(M, tm)
    Np = _round_up(N, tn)
    if Mp != M:
        x2 = jnp.pad(x2, ((0, Mp - M), (0, 0)))
    if Np != N:
        y2 = jnp.pad(y2, ((0, Np - N), (0, 0)))

    grid = (Mp // tm, Np // tn)   # j (N tiles) innermost; x tile reused over j

    # TODO(synk): for very large H (>= ~2048 at bf16) add a third grid axis
    # over H with an f32 VMEM accumulator instead of whole-H tiles.

    per_step_bytes = (tm * H * x2.dtype.itemsize
                      + tn * H * y2.dtype.itemsize
                      + tm * tn * 4)
    vmem_limit = int(min(max(4 * per_step_bytes + (4 << 20), 16 << 20),
                         100 << 20))

    cost = pl.CostEstimate(
        flops=2 * Mp * Np * H + 3 * Mp * Np,
        transcendentals=Mp + Np,
        bytes_accessed=(Mp * H * x2.dtype.itemsize
                        + grid[0] * Np * H * y2.dtype.itemsize
                        + Mp * Np * 4),
    )

    out = pl.pallas_call(
        functools.partial(_cosine_sim_kernel, inv_temp=1.0 / float(temp)),
        out_shape=jax.ShapeDtypeStruct((Mp, Np), jnp.float32),
        grid=grid,
        in_specs=[
            pl.BlockSpec((tm, H), lambda i, j: (i, 0)),  # x tile: reused over j
            pl.BlockSpec((tn, H), lambda i, j: (j, 0)),
        ],
        out_specs=pl.BlockSpec((tm, tn), lambda i, j: (i, j)),
        compiler_params=pltpu.CompilerParams(
            dimension_semantics=("parallel", "parallel"),
            vmem_limit_bytes=vmem_limit),
        cost_estimate=cost,
    )(x2, y2)

    out = out[:M, :N]
    return jnp.reshape(out, out_bshape)


def _reference(x, y, temp):
    x32 = x.astype(jnp.float32)
    y32 = y.astype(jnp.float32)
    num = jnp.sum(x32 * y32, axis=-1)
    nx = jnp.maximum(jnp.linalg.norm(x32, axis=-1), EPS)
    ny = jnp.maximum(jnp.linalg.norm(y32, axis=-1), EPS)
    return num / (nx * ny) / temp


if __name__ == "__main__":
    key = jax.random.PRNGKey(0)
    kx, ky, kx2, ky2 = jax.random.split(key, 4)
    temp = 0.05  # typical SimCSE temperature

    # Case 1: canonical SimCSE usage — z1.unsqueeze(1) vs z2.unsqueeze(0).
    B, H = 8, 32
    x = jax.random.normal(kx, (B, 1, H), dtype=jnp.float32)
    y = jax.random.normal(ky, (1, B, H), dtype=jnp.float32)
    out = jax.block_until_ready(similarity(x, y, temp))
    ref = _reference(x, y, temp)
    assert out.shape == (B, B), out.shape
    assert jnp.allclose(out, ref, atol=1e-3, rtol=1e-3), (
        float(jnp.max(jnp.abs(out - ref))))

    # Case 2: multi-tile grid, non-aligned sizes, bf16 inputs to the MXU.
    M2, N2, H2 = 300, 200, 96
    xb = jax.random.normal(kx2, (M2, 1, H2), dtype=jnp.bfloat16)
    yb = jax.random.normal(ky2, (1, N2, H2), dtype=jnp.bfloat16)
    out2 = jax.block_until_ready(similarity(xb, yb, temp))
    ref2 = _reference(xb, yb, temp)
    assert out2.shape == (M2, N2), out2.shape
    assert jnp.allclose(out2, ref2, atol=2e-2, rtol=2e-2), (
        float(jnp.max(jnp.abs(out2 - ref2))))

    print("KERNEL_OK")
</pallas_src>

<mosaic_0001>
module attributes {stable_mosaic.version = 11 : i64} {
  func.func @_cosine_sim_kernel(%arg0: i32, %arg1: i32, %arg2: memref<8x32xf32, #tpu.memory_space<vmem>>, %arg3: memref<128x32xf32, #tpu.memory_space<vmem>>, %arg4: memref<8x128xf32, #tpu.memory_space<vmem>>) attributes {dimension_semantics = [#tpu.dimension_semantics<parallel>, #tpu.dimension_semantics<parallel>], iteration_bounds = array<i64: 1, 1>, scalar_prefetch = 0 : i64, scratch_operands = 0 : i64, tpu.core_type = #tpu.core_type<tc>, window_params = [{transform_indices = @transform_0, window_bounds = array<i64: 8, 32>}, {transform_indices = @transform_1, window_bounds = array<i64: 128, 32>}, {transform_indices = @transform_2, window_bounds = array<i64: 8, 128>}]} {
    %c0 = arith.constant 0 : index
    %c0_0 = arith.constant 0 : index
    %0 = vector.load %arg2[%c0, %c0_0] : memref<8x32xf32, #tpu.memory_space<vmem>>, vector<8x32xf32>
    %c0_1 = arith.constant 0 : index
    %c0_2 = arith.constant 0 : index
    %1 = vector.load %arg3[%c0_1, %c0_2] : memref<128x32xf32, #tpu.memory_space<vmem>>, vector<128x32xf32>
    %cst = arith.constant dense<0.000000e+00> : vector<8x128xf32>
    %2 = tpu.matmul %0, %1, %cst {dimension_numbers = #tpu.dot_dimension_numbers<[1], [1], [0], [0], [0, 0, 1, 0], [], []>} : vector<8x32xf32>, vector<128x32xf32>, vector<8x128xf32> -> vector<8x128xf32>
    %3 = arith.mulf %0, %0 : vector<8x32xf32>
    %cst_3 = arith.constant dense<0.000000e+00> : vector<8xf32>
    %4 = vector.multi_reduction <add>, %3, %cst_3 [1] : vector<8x32xf32> to vector<8xf32>
    %5 = vector.shape_cast %4 : vector<8xf32> to vector<8x1xf32>
    %6 = math.sqrt %5 : vector<8x1xf32>
    %7 = arith.mulf %1, %1 : vector<128x32xf32>
    %cst_4 = arith.constant dense<0.000000e+00> : vector<128xf32>
    %8 = vector.multi_reduction <add>, %7, %cst_4 [1] : vector<128x32xf32> to vector<128xf32>
    %9 = vector.shape_cast %8 : vector<128xf32> to vector<128x1xf32>
    %10 = math.sqrt %9 : vector<128x1xf32>
    %cst_5 = arith.constant 9.99999993E-9 : f32
    %11 = vector.broadcast %cst_5 : f32 to vector<8x1xf32>
    %12 = arith.maximumf %6, %11 : vector<8x1xf32>
    %cst_6 = arith.constant 2.000000e+01 : f32
    %13 = vector.broadcast %cst_6 : f32 to vector<8x1xf32>
    %14 = arith.divf %13, %12 : vector<8x1xf32>
    %cst_7 = arith.constant 9.99999993E-9 : f32
    %15 = vector.broadcast %cst_7 : f32 to vector<128x1xf32>
    %16 = arith.maximumf %10, %15 : vector<128x1xf32>
    %cst_8 = arith.constant 1.000000e+00 : f32
    %17 = vector.broadcast %cst_8 : f32 to vector<128x1xf32>
    %18 = arith.divf %17, %16 : vector<128x1xf32>
    %19 = vector.broadcast %14 : vector<8x1xf32> to vector<8x128xf32>
    %20 = arith.mulf %2, %19 : vector<8x128xf32>
    %21 = tpu.transpose %18, [1, 0] : vector<128x1xf32> -> vector<1x128xf32>
    %22 = vector.broadcast %21 : vector<1x128xf32> to vector<8x128xf32>
    %23 = arith.mulf %20, %22 : vector<8x128xf32>
    %c0_9 = arith.constant 0 : index
    %c0_10 = arith.constant 0 : index
    %24 = vector.load %arg4[%c0_9, %c0_10] : memref<8x128xf32, #tpu.memory_space<vmem>>, vector<8x128xf32>
    tpu.vector_store %arg4[%c0_9, %c0_10], %23 {strides = array<i32>} : memref<8x128xf32, #tpu.memory_space<vmem>>, vector<8x128xf32>,
    return
  }
  func.func @transform_0(%arg0: i32, %arg1: i32) -> (i32, i32) {
    %c0_i32 = arith.constant 0 : i32
    %c0_i32_0 = arith.constant 0 : i32
    return %arg0, %c0_i32 : i32, i32
  }
  func.func @transform_1(%arg0: i32, %arg1: i32) -> (i32, i32) {
    %c0_i32 = arith.constant 0 : i32
    %c0_i32_0 = arith.constant 0 : i32
    return %arg1, %c0_i32 : i32, i32
  }
  func.func @transform_2(%arg0: i32, %arg1: i32) -> (i32, i32) {
    %c0_i32 = arith.constant 0 : i32
    return %arg0, %arg1 : i32, i32
  }
}

</mosaic_0001>

<llo_original>
// kernel: tpu_custom_call.1
$region0: #{tpu_custom_call.1}
  #allocation0 [shape = 'u32[]', space=smem, size = 0x4, offset = 0x4, fixed_abs, tag = 'smem constant byte address 0x4 - core index']
  #allocation1 [shape = 'u32[144,128]{1,0:T(1,128)}', space=vmem, size = 0x12000, scoped, tag = 'internal scratch']
  %s0 = inlined_call_operand.vmem [shape: f32[8,32], index: 0, kind: input, shape index: {}]
  %s1 = inlined_call_operand.vmem [shape: f32[128,32], index: 1, kind: input, shape index: {}]
  %s2 = inlined_call_operand.hbm [shape: f32[8,128], index: 2, kind: output, shape index: {}]
  %s3 = sld [smem:[#allocation0]]
  $region18: #{tpu_custom_call.1} parent=0
    _
  %s5 = ssub.s32 1, %s3
  %s6 = scalar_select 0, %s5, %s3
  $region1: #{tpu_custom_call.1} parent=0
    #allocation2 [shape = 'u8[4096]{0}', space=vmem, size = 0x1000, scoped, tag = 'output window, operand 0, single buffered']
    #allocation3 [shape = 's32[1]{0}', space=sflag, size = 0x4, scoped, tag = 'scoped memory for tpu_custom_call.1']
    %7 = vsyncpa [#allocation3], 0
    // Predicated region
    $region2: #{tpu_custom_call.1} parent=1 // pred_check
      _
    $region3: #{tpu_custom_call.1} parent=1 // pred_check_branch
      %9 = sbr.rel (0) target = $region5
    $region4: #{tpu_custom_call.1} parent=1 // pred_region
      _
    $region5: #{tpu_custom_call.1} parent=1 // pred_fallthru
      _
    // Predicated region
    $region6: #{tpu_custom_call.1} parent=1 // pred_check
      _
    $region7: #{tpu_custom_call.1} parent=1 // pred_check_branch
      %11 = sbr.rel (0) target = $region9
    $region8: #{tpu_custom_call.1} parent=1 // pred_region
      _
    $region9: #{tpu_custom_call.1} parent=1 // pred_fallthru
      _
    %v12 = vld [vmem:[%s0] sm:$0xff]
    %v13 = vld [vmem:[%s1] sm:$0xff]
    %v14 = vld [vmem:[%s1 + $0x8] sm:$0xff]
    %v15 = vld [vmem:[%s1 + $0x10] sm:$0xff]
    %v16 = vld [vmem:[%s1 + $0x18] sm:$0xff]
    %v17 = vld [vmem:[%s1 + $0x20] sm:$0xff]
    %v18 = vld [vmem:[%s1 + $0x28] sm:$0xff]
    %v19 = vld [vmem:[%s1 + $0x30] sm:$0xff]
    %v20 = vld [vmem:[%s1 + $0x38] sm:$0xff]
    %v21 = vld [vmem:[%s1 + $0x40] sm:$0xff]
    %v22 = vld [vmem:[%s1 + $0x48] sm:$0xff]
    %v23 = vld [vmem:[%s1 + $0x50] sm:$0xff]
    %v24 = vld [vmem:[%s1 + $0x58] sm:$0xff]
    %v25 = vld [vmem:[%s1 + $0x60] sm:$0xff]
    %v26 = vld [vmem:[%s1 + $0x68] sm:$0xff]
    %v27 = vld [vmem:[%s1 + $0x70] sm:$0xff]
    %v28 = vld [vmem:[%s1 + $0x78] sm:$0xff]
    %vm29 = vcmask 261120
    %v31 = vsel %vm29, %v12, 0
    %v34 = vsel %vm29, %v13, 0
    %v37 = vsel %vm29, %v14, 0
    %v40 = vsel %vm29, %v15, 0
    %v43 = vsel %vm29, %v16, 0
    %v46 = vsel %vm29, %v17, 0
    %v49 = vsel %vm29, %v18, 0
    %v52 = vsel %vm29, %v19, 0
    %v55 = vsel %vm29, %v20, 0
    %v58 = vsel %vm29, %v21, 0
    %v61 = vsel %vm29, %v22, 0
    %v64 = vsel %vm29, %v23, 0
    %v67 = vsel %vm29, %v24, 0
    %v70 = vsel %vm29, %v25, 0
    %v73 = vsel %vm29, %v26, 0
    %v76 = vsel %vm29, %v27, 0
    %v79 = vsel %vm29, %v28, 0
    %81 = vmatprep.subr.mxu0 0.0
    %82 = vmatpush1.xpose.msra.mxu0 %v34
    %83 = vmatprep.subr.mxu0 0.0
    %84 = vmatpush1.xpose.msra.mxu0 %v37
    %85 = vmatprep.subr.mxu0 0.0
    %86 = vmatpush1.xpose.msra.mxu0 %v40
    %87 = vmatprep.subr.mxu0 0.0
    %88 = vmatpush1.xpose.msra.mxu0 %v43
    %89 = vmatprep.subr.mxu0 0.0
    %90 = vmatpush1.xpose.msra.mxu0 %v46
    %91 = vmatprep.subr.mxu0 0.0
    %92 = vmatpush1.xpose.msra.mxu0 %v49
    %93 = vmatprep.subr.mxu0 0.0
    %94 = vmatpush1.xpose.msra.mxu0 %v52
    %95 = vmatprep.subr.mxu0 0.0
    %96 = vmatpush1.xpose.msra.mxu0 %v55
    %97 = vmatprep.subr.mxu0 0.0
    %98 = vmatpush1.xpose.msra.mxu0 %v58
    %99 = vmatprep.subr.mxu0 0.0
    %100 = vmatpush1.xpose.msra.mxu0 %v61
    %101 = vmatprep.subr.mxu0 0.0
    %102 = vmatpush1.xpose.msra.mxu0 %v64
    %103 = vmatprep.subr.mxu0 0.0
    %104 = vmatpush1.xpose.msra.mxu0 %v67
    %105 = vmatprep.subr.mxu0 0.0
    %106 = vmatpush1.xpose.msra.mxu0 %v70
    %107 = vmatprep.subr.mxu0 0.0
    %108 = vmatpush1.xpose.msra.mxu0 %v73
    %109 = vmatprep.subr.mxu0 0.0
    %110 = vmatpush1.xpose.msra.mxu0 %v76
    %111 = vmatprep.subr.mxu0 0.0
    %112 = vmatpush1.xpose.msra.mxu0 %v79
    %113 = vmatprep.subr.mxu0 0.0
    %114 = vmatpush1.xpose.msra.mxu0 0.0
    %115 = vmatprep.subr.mxu0 0.0
    %116 = vmatpush1.xpose.msra.mxu0 0.0
    %117 = vmatprep.subr.mxu0 0.0
    %118 = vmatpush1.xpose.msra.mxu0 0.0
    %119 = vmatprep.subr.mxu0 0.0
    %120 = vmatpush1.xpose.msra.mxu0 0.0
    %121 = vmatprep.subr.mxu0 0.0
    %122 = vmatpush1.xpose.msra.mxu0 0.0
    %123 = vmatprep.subr.mxu0 0.0
    %124 = vmatpush1.xpose.msra.mxu0 0.0
    %125 = vmatprep.subr.mxu0 0.0
    %126 = vmatpush1.xpose.msra.mxu0 0.0
    %127 = vmatprep.subr.mxu0 0.0
    %128 = vmatpush1.xpose.msra.mxu0 0.0
    %129 = vmatprep.subr.mxu0 0.0
    %130 = vmatpush1.xpose.msra.mxu0 0.0
    %131 = vmatprep.subr.mxu0 0.0
    %132 = vmatpush1.xpose.msra.mxu0 0.0
    %133 = vmatprep.subr.mxu0 0.0
    %134 = vmatpush1.xpose.msra.mxu0 0.0
    %135 = vmatprep.subr.mxu0 0.0
    %136 = vmatpush1.xpose.msra.mxu0 0.0
    %137 = vmatprep.subr.mxu0 0.0
    %138 = vmatpush1.xpose.msra.mxu0 0.0
    %139 = vmatprep.subr.mxu0 0.0
    %140 = vmatpush1.xpose.msra.mxu0 0.0
    %141 = vmatprep.subr.mxu0 0.0
    %142 = vmatpush1.xpose.msra.mxu0 0.0
    %143 = vmatprep.subr.mxu0 0.0
    %144 = vmatpush1.xpose.msra.mxu0 0.0
    %145 = vmatprep.mubr.f32.mxu0 0.0
    %146 = vmatmul.mubr.f32.gmra.mrb[0].mxu0 %v31
    %v147 = vpop.f32.mrb[0].mxu0
    %v148 = vadd.f32 0.0, %v147
    %v149 = vpop.f32.mrb[0].mxu0
    %150 = vdwg.mxu0
    %v151 = vmul.f32 %v12, %v12
    %v152 = vsel %vm29, %v151, 0.0
    %153 = vadd.xlane.f32.xlu0 %v152
    %v154 = vpop.xlane.xlu0 %153
    %v155 = vrsqrt.pop %v154
    %v156 = vmul.f32 %v154, %v155
    %vm157 = vcmp.eq.f32.partialorder %v154, inf
    %v158 = vsel %vm157, %v154, %v156
    %vm159 = vcmp.eq.f32.partialorder %v154, 0.0
    %v160 = vand.u32 %v154, 2147483648
    %v161 = vsel %vm159, %v160, %v158
    %v162 = vmul.f32 %v13, %v13
    %v163 = vmul.f32 %v14, %v14
    %v164 = vmul.f32 %v15, %v15
    %v165 = vmul.f32 %v16, %v16
    %v166 = vmul.f32 %v17, %v17
    %v167 = vmul.f32 %v18, %v18
    %v168 = vmul.f32 %v19, %v19
    %v169 = vmul.f32 %v20, %v20
    %v170 = vmul.f32 %v21, %v21
    %v171 = vmul.f32 %v22, %v22
    %v172 = vmul.f32 %v23, %v23
    %v173 = vmul.f32 %v24, %v24
    %v174 = vmul.f32 %v25, %v25
    %v175 = vmul.f32 %v26, %v26
    %v176 = vmul.f32 %v27, %v27
    %v177 = vmul.f32 %v28, %v28
    %v178 = vsel %vm29, %v162, 0.0
    %179 = vadd.xlane.f32.xlu0 %v178
    %v180 = vpop.xlane.xlu0 %179
    %v181 = vsel %vm29, %v163, 0.0
    %182 = vadd.xlane.f32.xlu0 %v181
    %v183 = vpop.xlane.xlu0 %182
    %v184 = vsel %vm29, %v164, 0.0
    %185 = vadd.xlane.f32.xlu0 %v184
    %v186 = vpop.xlane.xlu0 %185
    %v187 = vsel %vm29, %v165, 0.0
    %188 = vadd.xlane.f32.xlu0 %v187
    %v189 = vpop.xlane.xlu0 %188
    %v190 = vsel %vm29, %v166, 0.0
    %191 = vadd.xlane.f32.xlu0 %v190
    %v192 = vpop.xlane.xlu0 %191
    %v193 = vsel %vm29, %v167, 0.0
    %194 = vadd.xlane.f32.xlu0 %v193
    %v195 = vpop.xlane.xlu0 %194
    %v196 = vsel %vm29, %v168, 0.0
    %197 = vadd.xlane.f32.xlu0 %v196
    %v198 = vpop.xlane.xlu0 %197
    %v199 = vsel %vm29, %v169, 0.0
    %200 = vadd.xlane.f32.xlu0 %v199
    %v201 = vpop.xlane.xlu0 %200
    %v202 = vsel %vm29, %v170, 0.0
    %203 = vadd.xlane.f32.xlu0 %v202
    %v204 = vpop.xlane.xlu0 %203
    %v205 = vsel %vm29, %v171, 0.0
    %206 = vadd.xlane.f32.xlu0 %v205
    %v207 = vpop.xlane.xlu0 %206
    %v208 = vsel %vm29, %v172, 0.0
    %209 = vadd.xlane.f32.xlu0 %v208
    %v210 = vpop.xlane.xlu0 %209
    %v211 = vsel %vm29, %v173, 0.0
    %212 = vadd.xlane.f32.xlu0 %v211
    %v213 = vpop.xlane.xlu0 %212
    %v214 = vsel %vm29, %v174, 0.0
    %215 = vadd.xlane.f32.xlu0 %v214
    %v216 = vpop.xlane.xlu0 %215
    %v217 = vsel %vm29, %v175, 0.0
    %218 = vadd.xlane.f32.xlu0 %v217
    %v219 = vpop.xlane.xlu0 %218
    %v220 = vsel %vm29, %v176, 0.0
    %221 = vadd.xlane.f32.xlu0 %v220
    %v222 = vpop.xlane.xlu0 %221
    %v223 = vsel %vm29, %v177, 0.0
    %224 = vadd.xlane.f32.xlu0 %v223
    %v225 = vpop.xlane.xlu0 %224
    %v226 = vrsqrt.pop %v180
    %v227 = vmul.f32 %v180, %v226
    %vm228 = vcmp.eq.f32.partialorder %v180, inf
    %v229 = vsel %vm228, %v180, %v227
    %vm230 = vcmp.eq.f32.partialorder %v180, 0.0
    %v231 = vand.u32 %v180, 2147483648
    %v232 = vsel %vm230, %v231, %v229
    %v233 = vrsqrt.pop %v183
    %v234 = vmul.f32 %v183, %v233
    %vm235 = vcmp.eq.f32.partialorder %v183, inf
    %v236 = vsel %vm235, %v183, %v234
    %vm237 = vcmp.eq.f32.partialorder %v183, 0.0
    %v238 = vand.u32 %v183, 2147483648
    %v239 = vsel %vm237, %v238, %v236
    %v240 = vrsqrt.pop %v186
    %v241 = vmul.f32 %v186, %v240
    %vm242 = vcmp.eq.f32.partialorder %v186, inf
    %v243 = vsel %vm242, %v186, %v241
    %vm244 = vcmp.eq.f32.partialorder %v186, 0.0
    %v245 = vand.u32 %v186, 2147483648
    %v246 = vsel %vm244, %v245, %v243
    %v247 = vrsqrt.pop %v189
    %v248 = vmul.f32 %v189, %v247
    %vm249 = vcmp.eq.f32.partialorder %v189, inf
    %v250 = vsel %vm249, %v189, %v248
    %vm251 = vcmp.eq.f32.partialorder %v189, 0.0
    %v252 = vand.u32 %v189, 2147483648
    %v253 = vsel %vm251, %v252, %v250
    %v254 = vrsqrt.pop %v192
    %v255 = vmul.f32 %v192, %v254
    %vm256 = vcmp.eq.f32.partialorder %v192, inf
    %v257 = vsel %vm256, %v192, %v255
    %vm258 = vcmp.eq.f32.partialorder %v192, 0.0
    %v259 = vand.u32 %v192, 2147483648
    %v260 = vsel %vm258, %v259, %v257
    %v261 = vrsqrt.pop %v195
    %v262 = vmul.f32 %v195, %v261
    %vm263 = vcmp.eq.f32.partialorder %v195, inf
    %v264 = vsel %vm263, %v195, %v262
    %vm265 = vcmp.eq.f32.partialorder %v195, 0.0
    %v266 = vand.u32 %v195, 2147483648
    %v267 = vsel %vm265, %v266, %v264
    %v268 = vrsqrt.pop %v198
    %v269 = vmul.f32 %v198, %v268
    %vm270 = vcmp.eq.f32.partialorder %v198, inf
    %v271 = vsel %vm270, %v198, %v269
    %vm272 = vcmp.eq.f32.partialorder %v198, 0.0
    %v273 = vand.u32 %v198, 2147483648
    %v274 = vsel %vm272, %v273, %v271
    %v275 = vrsqrt.pop %v201
    %v276 = vmul.f32 %v201, %v275
    %vm277 = vcmp.eq.f32.partialorder %v201, inf
    %v278 = vsel %vm277, %v201, %v276
    %vm279 = vcmp.eq.f32.partialorder %v201, 0.0
    %v280 = vand.u32 %v201, 2147483648
    %v281 = vsel %vm279, %v280, %v278
    %v282 = vrsqrt.pop %v204
    %v283 = vmul.f32 %v204, %v282
    %vm284 = vcmp.eq.f32.partialorder %v204, inf
    %v285 = vsel %vm284, %v204, %v283
    %vm286 = vcmp.eq.f32.partialorder %v204, 0.0
    %v287 = vand.u32 %v204, 2147483648
    %v288 = vsel %vm286, %v287, %v285
    %v289 = vrsqrt.pop %v207
    %v290 = vmul.f32 %v207, %v289
    %vm291 = vcmp.eq.f32.partialorder %v207, inf
    %v292 = vsel %vm291, %v207, %v290
    %vm293 = vcmp.eq.f32.partialorder %v207, 0.0
    %v294 = vand.u32 %v207, 2147483648
    %v295 = vsel %vm293, %v294, %v292
    %v296 = vrsqrt.pop %v210
    %v297 = vmul.f32 %v210, %v296
    %vm298 = vcmp.eq.f32.partialorder %v210, inf
    %v299 = vsel %vm298, %v210, %v297
    %vm300 = vcmp.eq.f32.partialorder %v210, 0.0
    %v301 = vand.u32 %v210, 2147483648
    %v302 = vsel %vm300, %v301, %v299
    %v303 = vrsqrt.pop %v213
    %v304 = vmul.f32 %v213, %v303
    %vm305 = vcmp.eq.f32.partialorder %v213, inf
    %v306 = vsel %vm305, %v213, %v304
    %vm307 = vcmp.eq.f32.partialorder %v213, 0.0
    %v308 = vand.u32 %v213, 2147483648
    %v309 = vsel %vm307, %v308, %v306
    %v310 = vrsqrt.pop %v216
    %v311 = vmul.f32 %v216, %v310
    %vm312 = vcmp.eq.f32.partialorder %v216, inf
    %v313 = vsel %vm312, %v216, %v311
    %vm314 = vcmp.eq.f32.partialorder %v216, 0.0
    %v315 = vand.u32 %v216, 2147483648
    %v316 = vsel %vm314, %v315, %v313
    %v317 = vrsqrt.pop %v219
    %v318 = vmul.f32 %v219, %v317
    %vm319 = vcmp.eq.f32.partialorder %v219, inf
    %v320 = vsel %vm319, %v219, %v318
    %vm321 = vcmp.eq.f32.partialorder %v219, 0.0
    %v322 = vand.u32 %v219, 2147483648
    %v323 = vsel %vm321, %v322, %v320
    %v324 = vrsqrt.pop %v222
    %v325 = vmul.f32 %v222, %v324
    %vm326 = vcmp.eq.f32.partialorder %v222, inf
    %v327 = vsel %vm326, %v222, %v325
    %vm328 = vcmp.eq.f32.partialorder %v222, 0.0
    %v329 = vand.u32 %v222, 2147483648
    %v330 = vsel %vm328, %v329, %v327
    %v331 = vrsqrt.pop %v225
    %v332 = vmul.f32 %v225, %v331
    %vm333 = vcmp.eq.f32.partialorder %v225, inf
    %v334 = vsel %vm333, %v225, %v332
    %vm335 = vcmp.eq.f32.partialorder %v225, 0.0
    %v336 = vand.u32 %v225, 2147483648
    %v337 = vsel %vm335, %v336, %v334
    %v338 = vmax.f32 %v161, 1e-08
    %v339 = vrcp.pop %v338
    %v340 = vmul.f32 20.0, %v339
    %v341 = vmax.f32 %v232, 1e-08
    %v342 = vmax.f32 %v239, 1e-08
    %v343 = vmax.f32 %v246, 1e-08
    %v344 = vmax.f32 %v253, 1e-08
    %v345 = vmax.f32 %v260, 1e-08
    %v346 = vmax.f32 %v267, 1e-08
    %v347 = vmax.f32 %v274, 1e-08
    %v348 = vmax.f32 %v281, 1e-08
    %v349 = vmax.f32 %v288, 1e-08
    %v350 = vmax.f32 %v295, 1e-08
    %v351 = vmax.f32 %v302, 1e-08
    %v352 = vmax.f32 %v309, 1e-08
    %v353 = vmax.f32 %v316, 1e-08
    %v354 = vmax.f32 %v323, 1e-08
    %v355 = vmax.f32 %v330, 1e-08
    %v356 = vmax.f32 %v337, 1e-08
    %v357 = vrcp.pop %v341
    %v358 = vmul.f32 1.0, %v357
    %v359 = vrcp.pop %v342
    %v360 = vmul.f32 1.0, %v359
    %v361 = vrcp.pop %v343
    %v362 = vmul.f32 1.0, %v361
    %v363 = vrcp.pop %v344
    %v364 = vmul.f32 1.0, %v363
    %v365 = vrcp.pop %v345
    %v366 = vmul.f32 1.0, %v365
    %v367 = vrcp.pop %v346
    %v368 = vmul.f32 1.0, %v367
    %v369 = vrcp.pop %v347
    %v370 = vmul.f32 1.0, %v369
    %v371 = vrcp.pop %v348
    %v372 = vmul.f32 1.0, %v371
    %v373 = vrcp.pop %v349
    %v374 = vmul.f32 1.0, %v373
    %v375 = vrcp.pop %v350
    %v376 = vmul.f32 1.0, %v375
    %v377 = vrcp.pop %v351
    %v378 = vmul.f32 1.0, %v377
    %v379 = vrcp.pop %v352
    %v380 = vmul.f32 1.0, %v379
    %v381 = vrcp.pop %v353
    %v382 = vmul.f32 1.0, %v381
    %v383 = vrcp.pop %v354
    %v384 = vmul.f32 1.0, %v383
    %v385 = vrcp.pop %v355
    %v386 = vmul.f32 1.0, %v385
    %v387 = vrcp.pop %v356
    %v388 = vmul.f32 1.0, %v387
    %v389 = vmul.f32 %v148, %v340
    %390 = vxpose.xlu0.b32.start [1/16] %v358, 128
    %391 = vxpose.xlu0.b32.cont [2/16] %v360, 128
    %392 = vxpose.xlu0.b32.cont [3/16] %v362, 128
    %393 = vxpose.xlu0.b32.cont [4/16] %v364, 128
    %394 = vxpose.xlu0.b32.cont [5/16] %v366, 128
    %395 = vxpose.xlu0.b32.cont [6/16] %v368, 128
    %396 = vxpose.xlu0.b32.cont [7/16] %v370, 128
    %397 = vxpose.xlu0.b32.cont [8/16] %v372, 128
    %398 = vxpose.xlu0.b32.cont [9/16] %v374, 128
    %399 = vxpose.xlu0.b32.cont [10/16] %v376, 128
    %400 = vxpose.xlu0.b32.cont [11/16] %v378, 128
    %401 = vxpose.xlu0.b32.cont [12/16] %v380, 128
    %402 = vxpose.xlu0.b32.cont [13/16] %v382, 128
    %403 = vxpose.xlu0.b32.cont [14/16] %v384, 128
    %404 = vxpose.xlu0.b32.cont [15/16] %v386, 128
    %405 = vxpose.xlu0.b32.end [16/16] %v388, 128
    %v406 = vpop.trf.xlu0
    %v407 = vpop.trf.xlu0
    %v408 = vpop.trf.xlu0
    %v409 = vpop.trf.xlu0
    %v410 = vpop.trf.xlu0
    %v411 = vpop.trf.xlu0
    %v412 = vpop.trf.xlu0
    %v413 = vpop.trf.xlu0
    %v414 = vpop.trf.xlu0
    %v415 = vpop.trf.xlu0
    %v416 = vpop.trf.xlu0
    %v417 = vpop.trf.xlu0
    %v418 = vpop.trf.xlu0
    %v419 = vpop.trf.xlu0
    %v420 = vpop.trf.xlu0
    %v421 = vpop.trf.xlu0
    %v422 = vlaneseq
    %v423 = vshrl.u32 %v422, 7
    %v424 = vsub.s32 0, %v423
    %v425 = vrot.slane %v406, %v424
    %v426 = vmul.f32 %v389, %v425
    %427 = vst [vmem:[#allocation2] sm:$0xff] %v426
    // Predicated region
    $region10: #{tpu_custom_call.1} parent=1 // pred_check
      _
    $region11: #{tpu_custom_call.1} parent=1 // pred_check_branch
      %429 = sbr.rel (0) target = $region13
    $region12: #{tpu_custom_call.1} parent=1 // pred_region
      %s431 = ssub.s32 128, 128
      %432 = vsyncadd [#allocation3], %s431
      %s434 = sshll.u32 [#allocation2], 4
      %s435 = int_to_ptr.vmem [resolvable:$true] %s434
      %437 = dma.vmem_to_hbm [thread:$0]  %s435, 128, %s2, [#allocation3]
    $region13: #{tpu_custom_call.1} parent=1 // pred_fallthru
      _
    // Predicated region
    $region14: #{tpu_custom_call.1} parent=1 // pred_check
      _
    $region15: #{tpu_custom_call.1} parent=1 // pred_check_branch
      %439 = sbr.rel (0) target = $region17
    $region16: #{tpu_custom_call.1} parent=1 // pred_region
      %440 = dma.done [#allocation3], 128
    $region17: #{tpu_custom_call.1} parent=1 // pred_fallthru
      _
    %441 = vsyncpa [#allocation3], 1

</llo_original>
